<compile_context>
chip_gen: v7x
topology: tpu7x:2x2x1
jax: 0.10.0
libtpu: 0.0.40
codegen_flags: <defaults>
</compile_context>

<pallas_src>
import functools

import jax
import jax.numpy as jnp
from jax.experimental import pallas as pl
from jax.experimental.pallas import tpu as pltpu


def _row_candidates(b):
    """Row-block sizes that divide B and satisfy the (8, 128)/full-extent rule."""
    return [d for d in range(1, b + 1) if b % d == 0 and (d % 8 == 0 or d == b)]


def _choose_blocks(b, n, itemsize, budget_bytes):
    """Pick (row_block, col_block) for the flattened [B, N] streams.

    Blocks always divide the array exactly (no OOB tail) and respect the
    (multiple-of-8 / multiple-of-128 / full-extent) BlockSpec rules.
    """
    budget_elems = max(128, budget_bytes // itemsize)
    rows = _row_candidates(b)

    if n <= budget_elems:
        # Full rows; pack as many batches per block as the budget allows.
        fitting = [d for d in rows if d * n <= budget_elems]
        bb = max(fitting) if fitting else min(rows)
        return bb, n

    # A single row exceeds the budget: take the smallest legal row count and
    # tile the (lane) column axis with a 128-aligned divisor of N.
    bb = min(rows)
    per_row = max(128, budget_elems // bb)
    tc = None
    k = min(n // 128, per_row // 128)
    while k >= 1:
        c = k * 128
        if n % c == 0:
            tc = c
            break
        k -= 1
    if tc is None:
        tc = n  # no 128-aligned divisor; fall back to full rows (may exceed budget)
    return bb, tc


def _diff_noise_loss_kernel(*refs, inv_count, has_mask):
    if has_mask:
        x_ref, n_ref, pad_ref, w_ref, out_ref, acc_ref = refs
    else:
        x_ref, n_ref, w_ref, out_ref, acc_ref = refs
        pad_ref = None

    r = pl.program_id(0)
    c = pl.program_id(1)

    @pl.when((r == 0) & (c == 0))
    def _():
        acc_ref[...] = jnp.zeros_like(acc_ref)

    # Load in native dtype (bf16 stays bf16 over the DMA), cast to f32 on the VPU.
    d = x_ref[...].astype(jnp.float32) - n_ref[...].astype(jnp.float32)
    if has_mask:
        d = d * pad_ref[...].astype(jnp.float32)  # single mask multiply

    # Per-row (batch) weighted partial sums; keep a vector accumulator and only
    # collapse to the (1, 1) scalar on the last grid step.
    acc_ref[...] += jnp.sum(d * d, axis=-1, keepdims=True) * w_ref[...]

    @pl.when((r == pl.num_programs(0) - 1) & (c == pl.num_programs(1) - 1))
    def _():
        out_ref[...] = jnp.sum(acc_ref[...], keepdims=True) * inv_count


def diffusion_noise_loss(x_recon, noise, t, nonpadding=None, loss_type="l2",
                         block_budget_bytes=2 * 1024 * 1024):
    """x_recon, noise: [B, 1, M, T]; t: [B]; nonpadding: [B, T, M] or None."""
    if loss_type not in ("l1", "l2"):
        raise NotImplementedError()

    B, C, M, T = x_recon.shape
    assert C == 1, "module contract: channel dim is 1"
    N = M * T

    # Free reshapes of contiguous data -- no dtype upcast in the wrapper.
    x = x_recon.reshape(B, N)
    n = noise.reshape(B, N)

    # Per-batch weight precomputed once on a tiny [B] array (keeps exp/log off the hot loop).
    t_f = t.astype(jnp.float32)
    w = 0.398942 / t_f / (1.0 - t_f) * jnp.exp(-0.5 * jnp.log(t_f / (1.0 - t_f)) ** 2)
    w = w.reshape(B, 1)

    has_mask = nonpadding is not None
    inputs = [x, n]
    bb, tc = _choose_blocks(B, N, jnp.dtype(x.dtype).itemsize, block_budget_bytes)
    data_spec = pl.BlockSpec((bb, tc), lambda r, c: (r, c))
    in_specs = [data_spec, data_spec]

    if has_mask:
        # [B, T, M] -> [B, M, T] -> [B, M*T], cast to the data dtype (0/1 exact in bf16 too).
        pad = jnp.swapaxes(nonpadding, 1, 2).astype(x.dtype).reshape(B, N)
        inputs.append(pad)
        in_specs.append(pl.BlockSpec((bb, tc), lambda r, c: (r, c)))

    inputs.append(w)
    in_specs.append(pl.BlockSpec((bb, 1), lambda r, c: (r, 0)))

    grid = (B // bb, N // tc)
    inv_count = 1.0 / float(B * C * M * T)
    kernel = functools.partial(_diff_noise_loss_kernel,
                               inv_count=inv_count, has_mask=has_mask)

    out = pl.pallas_call(
        kernel,
        out_shape=jax.ShapeDtypeStruct((1, 1), jnp.float32),
        grid_spec=pltpu.PrefetchScalarGridSpec(
            num_scalar_prefetch=0,
            grid=grid,
            in_specs=in_specs,
            out_specs=pl.BlockSpec((1, 1), lambda r, c: (0, 0)),
            scratch_shapes=[pltpu.VMEM((bb, 1), jnp.float32)],
        ),
        compiler_params=pltpu.CompilerParams(
            dimension_semantics=("arbitrary", "arbitrary"),
            vmem_limit_bytes=32 * 1024 * 1024,
        ),
    )(*inputs)
    return out[0, 0]


def _reference(x_recon, noise, t, nonpadding=None):
    x_recon = x_recon.astype(jnp.float32)
    noise = noise.astype(jnp.float32)
    if nonpadding is not None:
        m = jnp.transpose(nonpadding, (0, 2, 1))[:, None].astype(jnp.float32)
        x_recon = x_recon * m
        noise = noise * m
    t = t.astype(jnp.float32)
    w = 0.398942 / t / (1.0 - t) * jnp.exp(-0.5 * jnp.log(t / (1.0 - t)) ** 2)
    return jnp.mean(w[:, None, None, None] * (x_recon - noise) ** 2)


if __name__ == "__main__":
    key = jax.random.PRNGKey(0)
    k1, k2, k3, k4 = jax.random.split(key, 4)

    # --- test 1: f32, masked, single block ---
    B, C, M, T = 2, 1, 16, 16
    x_recon = jax.random.normal(k1, (B, C, M, T), jnp.float32)
    noise = jax.random.normal(k2, (B, C, M, T), jnp.float32)
    t = jax.random.uniform(k3, (B,), jnp.float32, minval=0.1, maxval=0.9)
    nonpadding = (jax.random.uniform(k4, (B, T, M)) > 0.2).astype(jnp.float32)

    loss = diffusion_noise_loss(x_recon, noise, t, nonpadding, loss_type="l2")
    jax.block_until_ready(loss)
    ref = _reference(x_recon, noise, t, nonpadding)
    assert jnp.allclose(loss, ref, rtol=1e-5, atol=1e-6), (loss, ref)

    # --- test 2: nonpadding=None path (2-input kernel variant) ---
    loss2 = diffusion_noise_loss(x_recon, noise, t, None, loss_type="l2")
    jax.block_until_ready(loss2)
    ref2 = _reference(x_recon, noise, t, None)
    assert jnp.allclose(loss2, ref2, rtol=1e-5, atol=1e-6), (loss2, ref2)

    # --- test 3: larger batch with an artificially tiny block budget to force a 2x2 grid ---
    B3 = 16
    k5, k6, k7, k8 = jax.random.split(jax.random.PRNGKey(1), 4)
    x3 = jax.random.normal(k5, (B3, 1, M, T), jnp.float32)
    n3 = jax.random.normal(k6, (B3, 1, M, T), jnp.float32)
    t3 = jax.random.uniform(k7, (B3,), jnp.float32, minval=0.1, maxval=0.9)
    p3 = (jax.random.uniform(k8, (B3, T, M)) > 0.3).astype(jnp.float32)
    loss3 = diffusion_noise_loss(x3, n3, t3, p3, loss_type="l2", block_budget_bytes=512)
    jax.block_until_ready(loss3)
    ref3 = _reference(x3, n3, t3, p3)
    assert jnp.allclose(loss3, ref3, rtol=1e-5, atol=1e-6), (loss3, ref3)

    # --- test 4: bf16 inputs pass through without wrapper upcast ---
    x_bf = x_recon.astype(jnp.bfloat16)
    n_bf = noise.astype(jnp.bfloat16)
    loss4 = diffusion_noise_loss(x_bf, n_bf, t, nonpadding, loss_type="l2")
    jax.block_until_ready(loss4)
    ref4 = _reference(x_bf, n_bf, t, nonpadding)
    assert jnp.allclose(loss4, ref4, rtol=1e-4, atol=1e-6), (loss4, ref4)

    print("KERNEL_OK")
</pallas_src>

<mosaic_0001>
module attributes {stable_mosaic.version = 11 : i64} {
  func.func @_diff_noise_loss_kernel(%arg0: i32, %arg1: i32, %arg2: memref<2x256xf32, #tpu.memory_space<vmem>>, %arg3: memref<2x256xf32, #tpu.memory_space<vmem>>, %arg4: memref<2x256xf32, #tpu.memory_space<vmem>>, %arg5: memref<2x1xf32, #tpu.memory_space<vmem>>, %arg6: memref<1x1xf32, #tpu.memory_space<vmem>>, %arg7: memref<2x1xf32, #tpu.memory_space<vmem>>) attributes {dimension_semantics = [#tpu.dimension_semantics<arbitrary>, #tpu.dimension_semantics<arbitrary>], iteration_bounds = array<i64: 1, 1>, scalar_prefetch = 0 : i64, scratch_operands = 1 : i64, tpu.core_type = #tpu.core_type<tc>, window_params = [{transform_indices = @transform_0, window_bounds = array<i64: 2, 256>}, {transform_indices = @transform_1, window_bounds = array<i64: 2, 256>}, {transform_indices = @transform_2, window_bounds = array<i64: 2, 256>}, {transform_indices = @transform_3, window_bounds = array<i64: 2, 1>}, {pipeline_mode = #tpu.pipeline_mode<synchronous>, transform_indices = @transform_4, window_bounds = array<i64: 1, 1>}]} {
    %c0_i32 = arith.constant 0 : i32
    %0 = arith.cmpi eq, %arg0, %c0_i32 : i32
    %c0_i32_0 = arith.constant 0 : i32
    %1 = arith.cmpi eq, %arg1, %c0_i32_0 : i32
    %2 = arith.andi %0, %1 : i1
    %3 = arith.extui %2 : i1 to i32
    %c0_i32_1 = arith.constant 0 : i32
    %4 = arith.cmpi ne, %3, %c0_i32_1 : i32
    scf.if %4 {
      %cst_16 = arith.constant 0.000000e+00 : f32
      %23 = vector.broadcast %cst_16 : f32 to vector<2x1xf32>
      %c0_17 = arith.constant 0 : index
      %c0_18 = arith.constant 0 : index
      %24 = vector.load %arg7[%c0_17, %c0_18] : memref<2x1xf32, #tpu.memory_space<vmem>>, vector<2x1xf32>
      tpu.vector_store %arg7[%c0_17, %c0_18], %23 {strides = array<i32>} : memref<2x1xf32, #tpu.memory_space<vmem>>, vector<2x1xf32>,
    } else {
    }
    %c0 = arith.constant 0 : index
    %c0_2 = arith.constant 0 : index
    %5 = vector.load %arg2[%c0, %c0_2] : memref<2x256xf32, #tpu.memory_space<vmem>>, vector<2x256xf32>
    %c0_3 = arith.constant 0 : index
    %c0_4 = arith.constant 0 : index
    %6 = vector.load %arg3[%c0_3, %c0_4] : memref<2x256xf32, #tpu.memory_space<vmem>>, vector<2x256xf32>
    %7 = arith.subf %5, %6 : vector<2x256xf32>
    %c0_5 = arith.constant 0 : index
    %c0_6 = arith.constant 0 : index
    %8 = vector.load %arg4[%c0_5, %c0_6] : memref<2x256xf32, #tpu.memory_space<vmem>>, vector<2x256xf32>
    %9 = arith.mulf %7, %8 : vector<2x256xf32>
    %c0_7 = arith.constant 0 : index
    %c0_8 = arith.constant 0 : index
    %10 = vector.load %arg7[%c0_7, %c0_8] : memref<2x1xf32, #tpu.memory_space<vmem>>, vector<2x1xf32>
    %11 = arith.mulf %9, %9 : vector<2x256xf32>
    %cst = arith.constant dense<0.000000e+00> : vector<2xf32>
    %12 = vector.multi_reduction <add>, %11, %cst [1] : vector<2x256xf32> to vector<2xf32>
    %13 = vector.shape_cast %12 : vector<2xf32> to vector<2x1xf32>
    %c0_9 = arith.constant 0 : index
    %c0_10 = arith.constant 0 : index
    %14 = vector.load %arg5[%c0_9, %c0_10] : memref<2x1xf32, #tpu.memory_space<vmem>>, vector<2x1xf32>
    %15 = arith.mulf %13, %14 : vector<2x1xf32>
    %16 = arith.addf %10, %15 : vector<2x1xf32>
    %c0_11 = arith.constant 0 : index
    %c0_12 = arith.constant 0 : index
    %17 = vector.load %arg7[%c0_11, %c0_12] : memref<2x1xf32, #tpu.memory_space<vmem>>, vector<2x1xf32>
    tpu.vector_store %arg7[%c0_11, %c0_12], %16 {strides = array<i32>} : memref<2x1xf32, #tpu.memory_space<vmem>>, vector<2x1xf32>,
    %c0_i32_13 = arith.constant 0 : i32
    %18 = arith.cmpi eq, %arg0, %c0_i32_13 : i32
    %c0_i32_14 = arith.constant 0 : i32
    %19 = arith.cmpi eq, %arg1, %c0_i32_14 : i32
    %20 = arith.andi %18, %19 : i1
    %21 = arith.extui %20 : i1 to i32
    %c0_i32_15 = arith.constant 0 : i32
    %22 = arith.cmpi ne, %21, %c0_i32_15 : i32
    scf.if %22 {
      %c0_16 = arith.constant 0 : index
      %c0_17 = arith.constant 0 : index
      %23 = vector.load %arg7[%c0_16, %c0_17] : memref<2x1xf32, #tpu.memory_space<vmem>>, vector<2x1xf32>
      %24 = vector.shape_cast %23 : vector<2x1xf32> to vector<1x2x1xf32>
      %cst_18 = arith.constant dense<0.000000e+00> : vector<1xf32>
      %25 = vector.multi_reduction <add>, %24, %cst_18 [1, 2] : vector<1x2x1xf32> to vector<1xf32>
      %26 = vector.shape_cast %25 : vector<1xf32> to vector<1x1x1xf32>
      %27 = vector.extract %26[0, 0, 0] : f32 from vector<1x1x1xf32>
      %28 = vector.broadcast %27 : f32 to vector<1x1xf32>
      %cst_19 = arith.constant 0.001953125 : f32
      %29 = vector.broadcast %cst_19 : f32 to vector<1x1xf32>
      %30 = arith.mulf %28, %29 : vector<1x1xf32>
      %c0_20 = arith.constant 0 : index
      %c0_21 = arith.constant 0 : index
      %31 = vector.load %arg6[%c0_20, %c0_21] : memref<1x1xf32, #tpu.memory_space<vmem>>, vector<1x1xf32>
      tpu.vector_store %arg6[%c0_20, %c0_21], %30 {strides = array<i32>} : memref<1x1xf32, #tpu.memory_space<vmem>>, vector<1x1xf32>,
    } else {
    }
    return
  }
  func.func @transform_0(%arg0: i32, %arg1: i32) -> (i32, i32) {
    %c0_i32 = arith.constant 0 : i32
    return %arg0, %arg1 : i32, i32
  }
  func.func @transform_1(%arg0: i32, %arg1: i32) -> (i32, i32) {
    %c0_i32 = arith.constant 0 : i32
    return %arg0, %arg1 : i32, i32
  }
  func.func @transform_2(%arg0: i32, %arg1: i32) -> (i32, i32) {
    %c0_i32 = arith.constant 0 : i32
    return %arg0, %arg1 : i32, i32
  }
  func.func @transform_3(%arg0: i32, %arg1: i32) -> (i32, i32) {
    %c0_i32 = arith.constant 0 : i32
    %c0_i32_0 = arith.constant 0 : i32
    return %arg0, %c0_i32 : i32, i32
  }
  func.func @transform_4(%arg0: i32, %arg1: i32) -> (i32, i32) {
    %c0_i32 = arith.constant 0 : i32
    %c0_i32_0 = arith.constant 0 : i32
    %c0_i32_1 = arith.constant 0 : i32
    return %c0_i32, %c0_i32_0 : i32, i32
  }
}

</mosaic_0001>

<llo_original>
// kernel: tpu_custom_call.1
$region0: #{tpu_custom_call.1}
  #allocation0 [shape = 'u32[]', space=smem, size = 0x4, offset = 0x4, fixed_abs, tag = 'smem constant byte address 0x4 - core index']
  #allocation1 [shape = 'u32[144,128]{1,0:T(1,128)}', space=vmem, size = 0x12000, scoped, tag = 'internal scratch']
  #allocation2 [shape = 'f32[2,1]{1,0:T(2,128)}', space=vmem, size = 0x400, scoped, tag = 'scratch operand']
  %s0 = inlined_call_operand.hbm [shape: f32[2,256], index: 0, kind: input, shape index: {}]
  %s1 = inlined_call_operand.vmem [shape: f32[2,256], index: 1, kind: input, shape index: {}]
  %s2 = inlined_call_operand.vmem [shape: f32[2,256], index: 2, kind: input, shape index: {}]
  %s3 = inlined_call_operand.vmem [shape: f32[2,1], index: 3, kind: input, shape index: {}]
  %s4 = inlined_call_operand.hbm [shape: f32[1,1], index: 4, kind: output, shape index: {}]
  %s5 = sld [smem:[#allocation0]]
  $region38: #{tpu_custom_call.1} parent=0
    _
  %s7 = ssub.s32 1, %s5
  %s8 = scalar_select 0, %s7, %s5
  $region1: #{tpu_custom_call.1} parent=0
    #allocation3 [shape = 'u8[2048]{0}', space=vmem, size = 0x800, scoped, tag = 'input window, operand 0, single buffered']
    #allocation4 [shape = 's32[1]{0}', space=sflag, size = 0x4, scoped, tag = 'scoped memory for tpu_custom_call.1']
    #allocation5 [shape = 's32[1]{0}', space=sflag, size = 0x4, scoped, tag = 'scoped memory for tpu_custom_call.1']
    #allocation6 [shape = 'u8[512]{0}', space=vmem, size = 0x400, scoped, tag = 'output window, operand 0, single buffered']
    %9 = vsyncpa [#allocation4], 0
    %10 = vsyncpa [#allocation5], 0
    // Predicated region
    $region2: #{tpu_custom_call.1} parent=1 // pred_check
      _
    $region3: #{tpu_custom_call.1} parent=1 // pred_check_branch
      %12 = sbr.rel (0) target = $region5
    $region4: #{tpu_custom_call.1} parent=1 // pred_region
      %s14 = ssub.s32 64, 64
      %15 = vsyncadd [#allocation4], %s14
      %s17 = sshll.u32 [#allocation3], 4
      %s18 = int_to_ptr.vmem [resolvable:$true] %s17
      %20 = dma.hbm_to_vmem [thread:$0]  %s0, 64, %s18, [#allocation4]
    $region5: #{tpu_custom_call.1} parent=1 // pred_fallthru
      _
    // Predicated region
    $region6: #{tpu_custom_call.1} parent=1 // pred_check
      _
    $region7: #{tpu_custom_call.1} parent=1 // pred_check_branch
      %22 = sbr.rel (0) target = $region9
    $region8: #{tpu_custom_call.1} parent=1 // pred_region
      _
    $region9: #{tpu_custom_call.1} parent=1 // pred_fallthru
      _
    // Predicated region
    $region10: #{tpu_custom_call.1} parent=1 // pred_check
      _
    $region11: #{tpu_custom_call.1} parent=1 // pred_check_branch
      %24 = sbr.rel (0) target = $region13
    $region12: #{tpu_custom_call.1} parent=1 // pred_region
      _
    $region13: #{tpu_custom_call.1} parent=1 // pred_fallthru
      _
    // Predicated region
    $region14: #{tpu_custom_call.1} parent=1 // pred_check
      _
    $region15: #{tpu_custom_call.1} parent=1 // pred_check_branch
      %26 = sbr.rel (0) target = $region17
    $region16: #{tpu_custom_call.1} parent=1 // pred_region
      _
    $region17: #{tpu_custom_call.1} parent=1 // pred_fallthru
      _
    // Predicated region
    $region18: #{tpu_custom_call.1} parent=1 // pred_check
      _
    $region19: #{tpu_custom_call.1} parent=1 // pred_check_branch
      %28 = sbr.rel (0) target = $region21
    $region20: #{tpu_custom_call.1} parent=1 // pred_region
      %29 = dma.done [#allocation4], 64
    $region21: #{tpu_custom_call.1} parent=1 // pred_fallthru
      _
    %p30 = scmp.eq.s32.totalorder 0, 0
    %p31 = scmp.eq.s32.totalorder 0, 0
    %p32 = pnand %p30, %p31
    %p33 = pneg %p32
    // Predicated region
    $region22: #{tpu_custom_call.1} parent=1 // pred_check
      _
    $region23: #{tpu_custom_call.1} parent=1 // pred_check_branch
      %35 = sbr.rel (%p32) target = $region25
    $region24: #{tpu_custom_call.1} parent=1 // pred_region
      %vm36 = vcmask 1024
      %37 = vst.msk [vmem:[#allocation2] sm:$0x3] %vm36, 0.0
    $region25: #{tpu_custom_call.1} parent=1 // pred_fallthru
      _
    %v38 = vld [vmem:[#allocation3] sm:$0xf]
    %v39 = vld [vmem:[%s1] sm:$0xf]
    %v40 = vsub.f32 %v38, %v39
    %v41 = vld [vmem:[%s2] sm:$0xf]
    %v42 = vmul.f32 %v40, %v41
    %v43 = vld [vmem:[#allocation2] sm:$0x3]
    %v44 = vmul.f32 %v42, %v42
    %v47 = vunpack.c.l.s4 1983009808
    %v48 = vunpack.c.0.s8 %v47
    %v49 = vlaneseq
    %v50 = vshrl.u32 %v49, 7
    %v51 = vsub.s32 %v48, %v50
    %v52 = vrot.slane %v44, %v51
    %v53 = vcombine.high %v52, %v52
    %vm56 = vcmask 1041408
    %v57 = vsel %vm56, %v52, 0.0
    %v58 = vsel %vm56, %v53, 0.0
    %v59 = vadd.f32 %v57, %v58
    %60 = vadd.xlane.f32.xlu0 %v59
    %v61 = vpop.xlane.xlu0 %60
    %v62 = vld [vmem:[%s3] sm:$0x3]
    %v63 = vmul.f32 %v61, %v62
    %v64 = vadd.f32 %v43, %v63
    %vm65 = vcmask 1024
    %66 = vst.msk [vmem:[#allocation2] sm:$0x3] %vm65, %v64
    // Predicated region
    $region26: #{tpu_custom_call.1} parent=1 // pred_check
      _
    $region27: #{tpu_custom_call.1} parent=1 // pred_check_branch
      %68 = sbr.rel (%p32) target = $region29
    $region28: #{tpu_custom_call.1} parent=1 // pred_region
      %v69 = vld [vmem:[#allocation2] sm:$0x3]
      %v70 = vsel %vm65, %v69, 0.0
      %71 = vadd.xlane.f32.xlu0 %v70
      %v72 = vpop.xlane.xlu0 %71
      %v73 = vrot.slane %v72, 4
      %v74 = vadd.f32 %v72, %v73
      %v75 = vrot.slane %v74, 2
      %v76 = vadd.f32 %v74, %v75
      %v77 = vrot.slane %v76, 1
      %v78 = vadd.f32 %v76, %v77
      %s79 = vtos %v78
      %v80 = vstv %s79
      %v81 = vmul.f32 %v80, 0.001953125
      %vm82 = vcmask 0
      %83 = vst.msk [vmem:[#allocation6] sm:$0x1] %vm82, %v81
    $region29: #{tpu_custom_call.1} parent=1 // pred_fallthru
      _
    // Predicated region
    $region30: #{tpu_custom_call.1} parent=1 // pred_check
      _
    $region31: #{tpu_custom_call.1} parent=1 // pred_check_branch
      %85 = sbr.rel (0) target = $region33
    $region32: #{tpu_custom_call.1} parent=1 // pred_region
      %s87 = ssub.s32 16, 16
      %88 = vsyncadd [#allocation5], %s87
      %s90 = sshll.u32 [#allocation6], 4
      %s91 = int_to_ptr.vmem [resolvable:$true] %s90
      %93 = dma.vmem_to_hbm [thread:$0]  %s91, 16, %s4, [#allocation5]
    $region33: #{tpu_custom_call.1} parent=1 // pred_fallthru
      _
    // Predicated region
    $region34: #{tpu_custom_call.1} parent=1 // pred_check
      _
    $region35: #{tpu_custom_call.1} parent=1 // pred_check_branch
      %95 = sbr.rel (0) target = $region37
    $region36: #{tpu_custom_call.1} parent=1 // pred_region
      %96 = dma.done [#allocation5], 16
    $region37: #{tpu_custom_call.1} parent=1 // pred_fallthru
      _
    %97 = vsyncpa [#allocation4], 1
    %98 = vsyncpa [#allocation5], 1

</llo_original>
